<compile_context>
chip_gen: v5e
topology: v5e:2x2
jax: 0.10.0
libtpu: 0.0.40
codegen_flags: <defaults>
</compile_context>

<pallas_src>
import functools

import jax
import jax.numpy as jnp
from jax.experimental import pallas as pl
from jax.experimental.pallas import tpu as pltpu

# ---- model hyper-parameters (kept small / consistent with the module) ----
N_FEATURES = 128            # n_features
N_BLOCKS = 2                # n_blocks
N_LINEARS = 2               # n_linears_per_block
BATCH = 256                 # batch size (>= 2 batch tiles -> both v7x TCs busy)
USE_SCALE = True
SCALE = (1.0 / N_BLOCKS) if USE_SCALE else 1.0
TB = 128                    # batch tile (fills MXU rows; 2 tiles at BATCH=256)


def _resblocks_kernel(x_ref, wt_ref, b_ref, o_ref):
    """Grid = (batch_tiles,); ALL residual blocks run per grid step.

    x_ref:  (TB, F)  f32       input batch tile
    wt_ref: (NB, L, F, F) bf16 all blocks' pre-transposed, scale-folded weights
                               (index_map constant over grid -> DMA'd once, resident)
    b_ref:  (NB, L, 1, F) f32  all blocks' scale-folded biases
    o_ref:  (TB, F)            output batch tile
    """
    n_blocks, n_linears = wt_ref.shape[0], wt_ref.shape[1]

    x = x_ref[...].astype(jnp.float32)
    for blk in range(n_blocks):                 # static unroll: blocks
        identity = x
        h = x
        for l in range(n_linears):              # static unroll: linears
            # pre-activation ReLU, done in bf16 (exact for ReLU; halves vregs on v6e/v7x)
            h_bf = jnp.maximum(h.astype(jnp.bfloat16), jnp.bfloat16(0))
            h = jnp.dot(h_bf, wt_ref[blk, l],   # bf16 x bf16 -> f32 (MXU)
                        preferred_element_type=jnp.float32)
            h = h + b_ref[blk, l]               # bias broadcast, f32
        x = identity + h                        # residual (scale folded into last linear)
    o_ref[...] = x.astype(o_ref.dtype)


@functools.partial(jax.jit, static_argnames=("tb",))
def resblocks_forward(x, wt_bf16, bias_f32, *, tb=TB):
    B, F = x.shape
    n_blocks, n_linears = wt_bf16.shape[0], wt_bf16.shape[1]
    Bp = pl.cdiv(B, tb) * tb
    xp = x if Bp == B else jnp.pad(x, ((0, Bp - B), (0, 0)))

    out = pl.pallas_call(
        _resblocks_kernel,
        out_shape=jax.ShapeDtypeStruct((Bp, F), x.dtype),
        grid_spec=pltpu.PrefetchScalarGridSpec(
            num_scalar_prefetch=0,
            grid=(Bp // tb,),
            in_specs=[
                pl.BlockSpec((tb, F), lambda i: (i, 0)),
                # constant block index over the grid -> fetched once, kept resident
                pl.BlockSpec((n_blocks, n_linears, F, F), lambda i: (0, 0, 0, 0)),
                pl.BlockSpec((n_blocks, n_linears, 1, F), lambda i: (0, 0, 0, 0)),
            ],
            out_specs=pl.BlockSpec((tb, F), lambda i: (i, 0)),
        ),
        compiler_params=pltpu.CompilerParams(
            dimension_semantics=("parallel",)),
    )(xp, wt_bf16, bias_f32)
    return out[:B]


def prepare_params(w, bias, scale):
    """Pre-transpose W (kernel does h @ W.T as h @ wt), fold the residual scale
    into each block's LAST linear, and cast weights to bf16 for the MXU."""
    wt = jnp.swapaxes(w, -1, -2)                               # (NB, L, F, F) = W.T
    fold = jnp.ones((w.shape[1],), jnp.float32).at[-1].set(scale)
    wt = wt * fold[None, :, None, None]
    bias = bias * fold[None, :, None, None]
    return wt.astype(jnp.bfloat16), bias.astype(jnp.float32)


def resblocks_reference(x, wt_bf16, bias_f32):
    """Pure-JAX reference mirroring the kernel's numerics (bf16 matmul operands,
    f32 accumulation / elementwise, scale pre-folded into the last linear)."""
    h = x.astype(jnp.float32)
    n_blocks, n_linears = wt_bf16.shape[0], wt_bf16.shape[1]
    for blk in range(n_blocks):
        identity = h
        z = h
        for l in range(n_linears):
            z = jnp.maximum(z, 0.0)
            z = jnp.dot(z.astype(jnp.bfloat16), wt_bf16[blk, l],
                        preferred_element_type=jnp.float32) + bias_f32[blk, l, 0]
        h = identity + z
    return h.astype(x.dtype)


if __name__ == "__main__":
    key = jax.random.PRNGKey(0)
    kx, kw, kb = jax.random.split(key, 3)

    # Deterministic synthetic parameters (PyTorch-Linear-like uniform init).
    bound = 1.0 / (N_FEATURES ** 0.5)
    w = jax.random.uniform(kw, (N_BLOCKS, N_LINEARS, N_FEATURES, N_FEATURES),
                           minval=-bound, maxval=bound, dtype=jnp.float32)
    b = jax.random.uniform(kb, (N_BLOCKS, N_LINEARS, 1, N_FEATURES),
                           minval=-bound, maxval=bound, dtype=jnp.float32)
    wt_bf16, bias_f32 = prepare_params(w, b, SCALE)

    x = jax.random.normal(kx, (BATCH, N_FEATURES), dtype=jnp.float32)

    out = jax.block_until_ready(resblocks_forward(x, wt_bf16, bias_f32))
    ref = resblocks_reference(x, wt_bf16, bias_f32)

    assert out.shape == (BATCH, N_FEATURES)
    assert jnp.allclose(out, ref, atol=5e-3, rtol=5e-3), "mismatch vs reference"

    print("KERNEL_OK")
</pallas_src>

<mosaic_0001>
module attributes {stable_mosaic.version = 11 : i64} {
  func.func @_resblocks_kernel(%arg0: i32, %arg1: memref<128x128xf32, #tpu.memory_space<vmem>>, %arg2: memref<2x2x128x128xbf16, #tpu.memory_space<vmem>>, %arg3: memref<2x2x1x128xf32, #tpu.memory_space<vmem>>, %arg4: memref<128x128xf32, #tpu.memory_space<vmem>>) attributes {dimension_semantics = [#tpu.dimension_semantics<parallel>], iteration_bounds = array<i64: 2>, scalar_prefetch = 0 : i64, scratch_operands = 0 : i64, tpu.core_type = #tpu.core_type<tc>, window_params = [{transform_indices = @transform_0, window_bounds = array<i64: 128, 128>}, {pipeline_mode = #tpu.pipeline_mode<synchronous>, transform_indices = @transform_1, window_bounds = array<i64: 2, 2, 128, 128>}, {pipeline_mode = #tpu.pipeline_mode<synchronous>, transform_indices = @transform_2, window_bounds = array<i64: 2, 2, 1, 128>}, {transform_indices = @transform_3, window_bounds = array<i64: 128, 128>}]} {
    %c0 = arith.constant 0 : index
    %c0_0 = arith.constant 0 : index
    %0 = vector.load %arg1[%c0, %c0_0] : memref<128x128xf32, #tpu.memory_space<vmem>>, vector<128x128xf32>
    %1 = arith.truncf %0 : vector<128x128xf32> to vector<128x128xbf16>
    %cst = arith.constant 0.000000e+00 : bf16
    %2 = vector.broadcast %cst : bf16 to vector<128x128xbf16>
    %3 = arith.maximumf %1, %2 : vector<128x128xbf16>
    %c0_1 = arith.constant 0 : index
    %c0_2 = arith.constant 0 : index
    %c0_3 = arith.constant 0 : index
    %c0_4 = arith.constant 0 : index
    %4 = vector.load %arg2[%c0_1, %c0_2, %c0_3, %c0_4] : memref<2x2x128x128xbf16, #tpu.memory_space<vmem>>, vector<1x1x128x128xbf16>
    %5 = vector.shape_cast %4 : vector<1x1x128x128xbf16> to vector<128x128xbf16>
    %cst_5 = arith.constant dense<0.000000e+00> : vector<128x128xf32>
    %6 = tpu.matmul %3, %5, %cst_5 {dimension_numbers = #tpu.dot_dimension_numbers<[1], [0], [0], [1], [0, 0, 1, 1], [], []>} : vector<128x128xbf16>, vector<128x128xbf16>, vector<128x128xf32> -> vector<128x128xf32>
    %c0_6 = arith.constant 0 : index
    %c0_7 = arith.constant 0 : index
    %c0_8 = arith.constant 0 : index
    %c0_9 = arith.constant 0 : index
    %7 = vector.load %arg3[%c0_6, %c0_7, %c0_8, %c0_9] : memref<2x2x1x128xf32, #tpu.memory_space<vmem>>, vector<1x1x1x128xf32>
    %8 = vector.shape_cast %7 : vector<1x1x1x128xf32> to vector<1x128xf32>
    %9 = vector.broadcast %8 : vector<1x128xf32> to vector<128x128xf32>
    %10 = arith.addf %6, %9 : vector<128x128xf32>
    %11 = arith.truncf %10 : vector<128x128xf32> to vector<128x128xbf16>
    %cst_10 = arith.constant 0.000000e+00 : bf16
    %12 = vector.broadcast %cst_10 : bf16 to vector<128x128xbf16>
    %13 = arith.maximumf %11, %12 : vector<128x128xbf16>
    %c0_11 = arith.constant 0 : index
    %c1 = arith.constant 1 : index
    %c0_12 = arith.constant 0 : index
    %c0_13 = arith.constant 0 : index
    %14 = vector.load %arg2[%c0_11, %c1, %c0_12, %c0_13] : memref<2x2x128x128xbf16, #tpu.memory_space<vmem>>, vector<1x1x128x128xbf16>
    %15 = vector.shape_cast %14 : vector<1x1x128x128xbf16> to vector<128x128xbf16>
    %cst_14 = arith.constant dense<0.000000e+00> : vector<128x128xf32>
    %16 = tpu.matmul %13, %15, %cst_14 {dimension_numbers = #tpu.dot_dimension_numbers<[1], [0], [0], [1], [0, 0, 1, 1], [], []>} : vector<128x128xbf16>, vector<128x128xbf16>, vector<128x128xf32> -> vector<128x128xf32>
    %c0_15 = arith.constant 0 : index
    %c1_16 = arith.constant 1 : index
    %c0_17 = arith.constant 0 : index
    %c0_18 = arith.constant 0 : index
    %17 = vector.load %arg3[%c0_15, %c1_16, %c0_17, %c0_18] : memref<2x2x1x128xf32, #tpu.memory_space<vmem>>, vector<1x1x1x128xf32>
    %18 = vector.shape_cast %17 : vector<1x1x1x128xf32> to vector<1x128xf32>
    %19 = vector.broadcast %18 : vector<1x128xf32> to vector<128x128xf32>
    %20 = arith.addf %16, %19 : vector<128x128xf32>
    %21 = arith.addf %0, %20 : vector<128x128xf32>
    %22 = arith.truncf %21 : vector<128x128xf32> to vector<128x128xbf16>
    %cst_19 = arith.constant 0.000000e+00 : bf16
    %23 = vector.broadcast %cst_19 : bf16 to vector<128x128xbf16>
    %24 = arith.maximumf %22, %23 : vector<128x128xbf16>
    %c1_20 = arith.constant 1 : index
    %c0_21 = arith.constant 0 : index
    %c0_22 = arith.constant 0 : index
    %c0_23 = arith.constant 0 : index
    %25 = vector.load %arg2[%c1_20, %c0_21, %c0_22, %c0_23] : memref<2x2x128x128xbf16, #tpu.memory_space<vmem>>, vector<1x1x128x128xbf16>
    %26 = vector.shape_cast %25 : vector<1x1x128x128xbf16> to vector<128x128xbf16>
    %cst_24 = arith.constant dense<0.000000e+00> : vector<128x128xf32>
    %27 = tpu.matmul %24, %26, %cst_24 {dimension_numbers = #tpu.dot_dimension_numbers<[1], [0], [0], [1], [0, 0, 1, 1], [], []>} : vector<128x128xbf16>, vector<128x128xbf16>, vector<128x128xf32> -> vector<128x128xf32>
    %c1_25 = arith.constant 1 : index
    %c0_26 = arith.constant 0 : index
    %c0_27 = arith.constant 0 : index
    %c0_28 = arith.constant 0 : index
    %28 = vector.load %arg3[%c1_25, %c0_26, %c0_27, %c0_28] : memref<2x2x1x128xf32, #tpu.memory_space<vmem>>, vector<1x1x1x128xf32>
    %29 = vector.shape_cast %28 : vector<1x1x1x128xf32> to vector<1x128xf32>
    %30 = vector.broadcast %29 : vector<1x128xf32> to vector<128x128xf32>
    %31 = arith.addf %27, %30 : vector<128x128xf32>
    %32 = arith.truncf %31 : vector<128x128xf32> to vector<128x128xbf16>
    %cst_29 = arith.constant 0.000000e+00 : bf16
    %33 = vector.broadcast %cst_29 : bf16 to vector<128x128xbf16>
    %34 = arith.maximumf %32, %33 : vector<128x128xbf16>
    %c1_30 = arith.constant 1 : index
    %c1_31 = arith.constant 1 : index
    %c0_32 = arith.constant 0 : index
    %c0_33 = arith.constant 0 : index
    %35 = vector.load %arg2[%c1_30, %c1_31, %c0_32, %c0_33] : memref<2x2x128x128xbf16, #tpu.memory_space<vmem>>, vector<1x1x128x128xbf16>
    %36 = vector.shape_cast %35 : vector<1x1x128x128xbf16> to vector<128x128xbf16>
    %cst_34 = arith.constant dense<0.000000e+00> : vector<128x128xf32>
    %37 = tpu.matmul %34, %36, %cst_34 {dimension_numbers = #tpu.dot_dimension_numbers<[1], [0], [0], [1], [0, 0, 1, 1], [], []>} : vector<128x128xbf16>, vector<128x128xbf16>, vector<128x128xf32> -> vector<128x128xf32>
    %c1_35 = arith.constant 1 : index
    %c1_36 = arith.constant 1 : index
    %c0_37 = arith.constant 0 : index
    %c0_38 = arith.constant 0 : index
    %38 = vector.load %arg3[%c1_35, %c1_36, %c0_37, %c0_38] : memref<2x2x1x128xf32, #tpu.memory_space<vmem>>, vector<1x1x1x128xf32>
    %39 = vector.shape_cast %38 : vector<1x1x1x128xf32> to vector<1x128xf32>
    %40 = vector.broadcast %39 : vector<1x128xf32> to vector<128x128xf32>
    %41 = arith.addf %37, %40 : vector<128x128xf32>
    %42 = arith.addf %21, %41 : vector<128x128xf32>
    %c0_39 = arith.constant 0 : index
    %c0_40 = arith.constant 0 : index
    %43 = vector.load %arg4[%c0_39, %c0_40] : memref<128x128xf32, #tpu.memory_space<vmem>>, vector<128x128xf32>
    tpu.vector_store %arg4[%c0_39, %c0_40], %42 {strides = array<i32>} : memref<128x128xf32, #tpu.memory_space<vmem>>, vector<128x128xf32>,
    return
  }
  func.func @transform_0(%arg0: i32) -> (i32, i32) {
    %c0_i32 = arith.constant 0 : i32
    %c0_i32_0 = arith.constant 0 : i32
    return %arg0, %c0_i32 : i32, i32
  }
  func.func @transform_1(%arg0: i32) -> (i32, i32, i32, i32) {
    %c0_i32 = arith.constant 0 : i32
    %c0_i32_0 = arith.constant 0 : i32
    %c0_i32_1 = arith.constant 0 : i32
    %c0_i32_2 = arith.constant 0 : i32
    %c0_i32_3 = arith.constant 0 : i32
    return %c0_i32, %c0_i32_0, %c0_i32_1, %c0_i32_2 : i32, i32, i32, i32
  }
  func.func @transform_2(%arg0: i32) -> (i32, i32, i32, i32) {
    %c0_i32 = arith.constant 0 : i32
    %c0_i32_0 = arith.constant 0 : i32
    %c0_i32_1 = arith.constant 0 : i32
    %c0_i32_2 = arith.constant 0 : i32
    %c0_i32_3 = arith.constant 0 : i32
    return %c0_i32, %c0_i32_0, %c0_i32_1, %c0_i32_2 : i32, i32, i32, i32
  }
  func.func @transform_3(%arg0: i32) -> (i32, i32) {
    %c0_i32 = arith.constant 0 : i32
    %c0_i32_0 = arith.constant 0 : i32
    return %arg0, %c0_i32 : i32, i32
  }
}

</mosaic_0001>

<llo_original>
// kernel: resblocks_forward.1
$region0: #{resblocks_forward.1}
  #allocation0 [shape = 'u32[]', space=smem, size = 0x4, offset = 0x4, fixed_abs, tag = 'smem constant byte address 0x4 - core index']
  #allocation1 [shape = 'u32[72,128]{1,0:T(1,128)}', space=vmem, size = 0x9000, scoped, tag = 'internal scratch']
  %s0 = inlined_call_operand.hbm [shape: f32[256,128], index: 0, kind: input, shape index: {}]
  %s1 = inlined_call_operand.hbm [shape: bf16[2,2,128,128], index: 1, kind: input, shape index: {}]
  %s2 = inlined_call_operand.hbm [shape: f32[2,2,1,128], index: 2, kind: input, shape index: {}]
  %s3 = inlined_call_operand.hbm [shape: f32[256,128], index: 3, kind: output, shape index: {}]
  %s4 = sld [smem:[#allocation0]]
  $region57: #{resblocks_forward.1} parent=0
    _
  %s6 = ssub.s32 1, %s4
  %s7 = scalar_select 0, %s6, %s4
  $region1: #{resblocks_forward.1} parent=0
    #allocation2 [shape = 'u8[131072]{0}', space=vmem, size = 0x20000, scoped, tag = 'input window, operand 0']
    #allocation3 [shape = 's32[2]{0}', space=sflag, size = 0x8, scoped, tag = 'scoped memory for resblocks_forward.1']
    #allocation4 [shape = 's32[2]{0}', space=sflag, size = 0x8, scoped, tag = 'scoped memory for resblocks_forward.1']
    #allocation5 [shape = 'u8[131072]{0}', space=vmem, size = 0x20000, scoped, tag = 'input window, operand 1, single buffered']
    #allocation6 [shape = 's32[1]{0}', space=sflag, size = 0x4, scoped, tag = 'scoped memory for resblocks_forward.1']
    #allocation7 [shape = 'u8[2048]{0}', space=vmem, size = 0x800, scoped, tag = 'input window, operand 2, single buffered']
    #allocation8 [shape = 'u8[131072]{0}', space=vmem, size = 0x20000, scoped, tag = 'output window, operand 0']
    %8 = vsyncpa [#allocation3], 0
    %s9 = scalar_lea.sflag [#allocation3], 1
    %10 = vsyncpa %s9, 0
    %11 = vsyncpa [#allocation6], 0
    %12 = vsyncpa [#allocation4], 0
    %s13 = scalar_lea.sflag [#allocation4], 1
    %14 = vsyncpa %s13, 0
    loop: start=0, step=1, limit=4
    $region2: #{resblocks_forward.1} parent=1 // loop_pre_header
      _
    $region3: #{resblocks_forward.1} parent=1 // loop_header
      %s16 = sphi 0, %s20
      %p17 = scmp.ge.s32.totalorder %s16, 4
      %s26 = sphi 0, %s28
      %s29 = sphi 0, %s26
      %s30 = sphi 0, %s29
      %s46 = sphi 0, %s30
      %s50 = sphi 0, %s50
      %s52 = sphi 0, %s50
      %s53 = sphi 0, %s52
      %s67 = sphi 0, %s53
      %s71 = sphi 0, %s71
      %s73 = sphi 0, %s71
      %s74 = sphi 0, %s73
      %s88 = sphi 0, %s74
      %s94 = sphi 0, %s96
      %s97 = sphi 0, %s94
      %s98 = sphi 0, %s97
      %s114 = sphi 0, %s98
    $region4: #{resblocks_forward.1} parent=1 // loop_header_branch
      %19 = sbr.rel (%p17) target = $region8
    $region5: #{resblocks_forward.1} parent=1 // loop_body
      %s21 = ssub.s32 %s16, 1
      %s22 = ssub.s32 %s16, 2
      %s23 = sadd.s32 %s16, 1
      %s24 = ssub.s32 %s16, %s23
      %p25 = scmp.eq.s32.totalorder %s24, 0
      %s27 = sadd.s32 %s26, 1
      %s28 = scalar_select %p25, %s26, %s27
      %p31 = pneg %p25
      %p32 = scmp.eq.s32.totalorder %s16, 1
      %p33 = por %p31, %p32
      %p34 = scmp.ne.s32.totalorder %s26, %s29
      %p35 = scmp.eq.s32.totalorder %s16, 0
      %p36 = por %p34, %p35
      %p37 = scmp.ne.s32.totalorder %s26, %s29
      %p38 = scmp.eq.s32.totalorder %s21, 1
      %p39 = por %p37, %p38
      %p40 = scmp.ne.s32.totalorder %s29, %s30
      %p41 = scmp.eq.s32.totalorder %s21, 0
      %p42 = por %p40, %p41
      %p43 = scmp.ne.s32.totalorder %s29, %s30
      %p44 = scmp.eq.s32.totalorder %s22, 1
      %p45 = por %p43, %p44
      %p47 = scmp.ne.s32.totalorder %s30, %s46
      %p48 = scmp.eq.s32.totalorder %s22, 0
      %p49 = por %p47, %p48
      %s51 = sadd.s32 %s50, 1
      %p54 = scmp.eq.s32.totalorder %s16, 1
      %p55 = scmp.ne.s32.totalorder %s50, %s52
      %p56 = scmp.eq.s32.totalorder %s16, 0
      %p57 = por %p55, %p56
      %p58 = scmp.ne.s32.totalorder %s50, %s52
      %p59 = scmp.eq.s32.totalorder %s21, 1
      %p60 = por %p58, %p59
      %p61 = scmp.ne.s32.totalorder %s52, %s53
      %p62 = scmp.eq.s32.totalorder %s21, 0
      %p63 = por %p61, %p62
      %p64 = scmp.ne.s32.totalorder %s52, %s53
      %p65 = scmp.eq.s32.totalorder %s22, 1
      %p66 = por %p64, %p65
      %p68 = scmp.ne.s32.totalorder %s53, %s67
      %p69 = scmp.eq.s32.totalorder %s22, 0
      %p70 = por %p68, %p69
      %s72 = sadd.s32 %s71, 1
      %p75 = scmp.eq.s32.totalorder %s16, 1
      %p76 = scmp.ne.s32.totalorder %s71, %s73
      %p77 = scmp.eq.s32.totalorder %s16, 0
      %p78 = por %p76, %p77
      %p79 = scmp.ne.s32.totalorder %s71, %s73
      %p80 = scmp.eq.s32.totalorder %s21, 1
      %p81 = por %p79, %p80
      %p82 = scmp.ne.s32.totalorder %s73, %s74
      %p83 = scmp.eq.s32.totalorder %s21, 0
      %p84 = por %p82, %p83
      %p85 = scmp.ne.s32.totalorder %s73, %s74
      %p86 = scmp.eq.s32.totalorder %s22, 1
      %p87 = por %p85, %p86
      %p89 = scmp.ne.s32.totalorder %s74, %s88
      %p90 = scmp.eq.s32.totalorder %s22, 0
      %p91 = por %p89, %p90
      %s92 = ssub.s32 %s16, %s23
      %p93 = scmp.eq.s32.totalorder %s92, 0
      %s95 = sadd.s32 %s94, 1
      %s96 = scalar_select %p93, %s94, %s95
      %p99 = pneg %p93
      %p100 = scmp.eq.s32.totalorder %s16, 1
      %p101 = por %p99, %p100
      %p102 = scmp.ne.s32.totalorder %s94, %s97
      %p103 = scmp.eq.s32.totalorder %s16, 0
      %p104 = por %p102, %p103
      %p105 = scmp.ne.s32.totalorder %s94, %s97
      %p106 = scmp.eq.s32.totalorder %s21, 1
      %p107 = por %p105, %p106
      %p108 = scmp.ne.s32.totalorder %s97, %s98
      %p109 = scmp.eq.s32.totalorder %s21, 0
      %p110 = por %p108, %p109
      %p111 = scmp.ne.s32.totalorder %s97, %s98
      %p112 = scmp.eq.s32.totalorder %s22, 1
      %p113 = por %p111, %p112
      %p115 = scmp.ne.s32.totalorder %s98, %s114
      %p116 = scmp.eq.s32.totalorder %s22, 0
      %p117 = por %p115, %p116
      %p118 = scmp.le.s32.totalorder 1, %s16
      %p119 = scmp.lt.s32.totalorder %s16, 3
      %p120 = pnand %p118, %p119
      %p121 = pneg %p120
      // Predicated region
      $region9: #{resblocks_forward.1} parent=5 // pred_check
        _
      $region10: #{resblocks_forward.1} parent=5 // pred_check_branch
        %123 = sbr.rel (%p120) target = $region12
      $region11: #{resblocks_forward.1} parent=5 // pred_region
        %s124 = ssub.s32 %s16, 1
        // Predicated region
        $region13: #{resblocks_forward.1} parent=11 // pred_check
          %p125 = pneg %p63
        $region14: #{resblocks_forward.1} parent=11 // pred_check_branch
          %127 = sbr.rel (%p125) target = $region16
        $region15: #{resblocks_forward.1} parent=11 // pred_region
          %129 = vsyncadd [#allocation6], 0
          %s130 = sshll.u32 %s1, 4
          %s131 = int_to_ptr.hbm [resolvable:$true] %s130
          %s132 = sshll.u32 [#allocation5], 4
          %s133 = int_to_ptr.vmem [resolvable:$true] %s132
          %138 = dma.hbm_to_vmem [thread:$0]  %s131, 4096, %s133, [#allocation6], 64, 64, 4
        $region16: #{resblocks_forward.1} parent=11 // pred_fallthru
          _
        // Predicated region
        $region17: #{resblocks_forward.1} parent=11 // pred_check
          %p139 = pneg %p84
        $region18: #{resblocks_forward.1} parent=11 // pred_check_branch
          %141 = sbr.rel (%p139) target = $region20
        $region19: #{resblocks_forward.1} parent=11 // pred_region
          %143 = vsyncadd [#allocation6], 0
          %s144 = sshll.u32 %s2, 4
          %s145 = int_to_ptr.hbm [resolvable:$true] %s144
          %s146 = sshll.u32 [#allocation7], 4
          %s147 = int_to_ptr.vmem [resolvable:$true] %s146
          %152 = dma.hbm_to_vmem [thread:$0]  %s145, 64, %s147, [#allocation6], 16, 16, 1
        $region20: #{resblocks_forward.1} parent=11 // pred_fallthru
          _
      $region12: #{resblocks_forward.1} parent=5 // pred_fallthru
        _
      %p153 = scmp.lt.s32.totalorder %s16, 2
      // Predicated region
      $region21: #{resblocks_forward.1} parent=5 // pred_check
        %p154 = pneg %p153
      $region22: #{resblocks_forward.1} parent=5 // pred_check_branch
        %156 = sbr.rel (%p154) target = $region24
      $region23: #{resblocks_forward.1} parent=5 // pred_region
        // Predicated region
        $region25: #{resblocks_forward.1} parent=23 // pred_check
          %p157 = pneg %p36
        $region26: #{resblocks_forward.1} parent=23 // pred_check_branch
          %159 = sbr.rel (%p157) target = $region28
        $region27: #{resblocks_forward.1} parent=23 // pred_region
          %s160 = sand.u32 %s26, 1
          %s161 = scalar_lea.sflag [#allocation3], %s160
          %s162 = sand.u32 %s26, 1
          %s163 = smul.addr %s162, 128
          %s164 = scalar_lea.vmem [#allocation2], %s163
          %s165 = smul.u32 16, %s16
          %167 = vsyncadd %s161, 0
          %s168 = smul.addr %s165, 8
          %s169 = scalar_lea.hbm %s0, %s168
          %s170 = sshll.u32 %s169, 4
          %s171 = int_to_ptr.hbm [resolvable:$true] %s170
          %s172 = sshll.u32 %s164, 4
          %s173 = int_to_ptr.vmem [resolvable:$true] %s172
          %178 = dma.hbm_to_vmem [thread:$0]  %s171, 2048, %s173, %s161, 128, 128, 8
        $region28: #{resblocks_forward.1} parent=23 // pred_fallthru
          _
      $region24: #{resblocks_forward.1} parent=5 // pred_fallthru
        _
      %p179 = scmp.le.s32.totalorder 1, %s16
      %p180 = scmp.lt.s32.totalorder %s16, 3
      %p181 = pnand %p179, %p180
      %p182 = pneg %p181
      // Predicated region
      $region29: #{resblocks_forward.1} parent=5 // pred_check
        _
      $region30: #{resblocks_forward.1} parent=5 // pred_check_branch
        %184 = sbr.rel (%p181) target = $region32
      $region31: #{resblocks_forward.1} parent=5 // pred_region
        %s185 = ssub.s32 %s16, 1
        %s186 = sand.u32 %s29, 1
        %s187 = scalar_lea.sflag [#allocation3], %s186
        %s188 = sand.u32 %s29, 1
        %s189 = smul.addr %s188, 128
        %s190 = scalar_lea.vmem [#allocation2], %s189
        // Predicated region
        $region33: #{resblocks_forward.1} parent=31 // pred_check
          %p191 = pneg %p42
        $region34: #{resblocks_forward.1} parent=31 // pred_check_branch
          %193 = sbr.rel (%p191) target = $region36
        $region35: #{resblocks_forward.1} parent=31 // pred_region
          %195 = dma.done %s187, 2048
        $region36: #{resblocks_forward.1} parent=31 // pred_fallthru
          _
        // Predicated region
        $region37: #{resblocks_forward.1} parent=31 // pred_check
          %p196 = pneg %p63
        $region38: #{resblocks_forward.1} parent=31 // pred_check_branch
          %198 = sbr.rel (%p196) target = $region40
        $region39: #{resblocks_forward.1} parent=31 // pred_region
          %200 = dma.done [#allocation6], 4096
        $region40: #{resblocks_forward.1} parent=31 // pred_fallthru
          _
        // Predicated region
        $region41: #{resblocks_forward.1} parent=31 // pred_check
          %p201 = pneg %p84
        $region42: #{resblocks_forward.1} parent=31 // pred_check_branch
          %203 = sbr.rel (%p201) target = $region44
        $region43: #{resblocks_forward.1} parent=31 // pred_region
          %205 = dma.done [#allocation6], 64
        $region44: #{resblocks_forward.1} parent=31 // pred_fallthru
          _
        %s206 = sand.u32 %s29, 1
        %s207 = scalar_lea.sflag [#allocation3], %s206
        %s208 = sand.u32 %s29, 1
        %s209 = smul.addr %s208, 128
        %s210 = scalar_lea.vmem [#allocation2], %s209
        %p211 = pneg %p42
        %p212 = pneg %p39
        %p213 = pneg %p63
        %p214 = pneg %p60
        %p215 = pneg %p84
        %p216 = pneg %p81
        %p217 = pneg %p110
        %p218 = pneg %p107
        %s219 = sand.u32 %s97, 1
        %s220 = scalar_lea.sflag [#allocation4], %s219
        %s221 = sand.u32 %s97, 1
        %s222 = smul.addr %s221, 128
        %s223 = scalar_lea.vmem [#allocation8], %s222
        %s224 = smul.u32 16, %s21
        %s225 = smul.u32 16, %s21
        %v226 = vld [vmem:[%s190] sm:$0xff]
        %v227 = vld [vmem:[%s190 + $0x8] sm:$0xff]
        %v228 = vld [vmem:[%s190 + $0x10] sm:$0xff]
        %v229 = vld [vmem:[%s190 + $0x18] sm:$0xff]
        %v230 = vld [vmem:[%s190 + $0x20] sm:$0xff]
        %v231 = vld [vmem:[%s190 + $0x28] sm:$0xff]
        %v232 = vld [vmem:[%s190 + $0x30] sm:$0xff]
        %v233 = vld [vmem:[%s190 + $0x38] sm:$0xff]
        %v234 = vld [vmem:[%s190 + $0x40] sm:$0xff]
        %v235 = vld [vmem:[%s190 + $0x48] sm:$0xff]
        %v236 = vld [vmem:[%s190 + $0x50] sm:$0xff]
        %v237 = vld [vmem:[%s190 + $0x58] sm:$0xff]
        %v238 = vld [vmem:[%s190 + $0x60] sm:$0xff]
        %v239 = vld [vmem:[%s190 + $0x68] sm:$0xff]
        %v240 = vld [vmem:[%s190 + $0x70] sm:$0xff]
        %v241 = vld [vmem:[%s190 + $0x78] sm:$0xff]
        %v242 = vpack.c.bf16 %v226, %v226
        %v243 = vpack.c.bf16 %v227, %v227
        %v244 = vpack.c.bf16 %v228, %v228
        %v245 = vpack.c.bf16 %v229, %v229
        %v246 = vpack.c.bf16 %v230, %v230
        %v247 = vpack.c.bf16 %v231, %v231
        %v248 = vpack.c.bf16 %v232, %v232
        %v249 = vpack.c.bf16 %v233, %v233
        %v250 = vpack.c.bf16 %v234, %v234
        %v251 = vpack.c.bf16 %v235, %v235
        %v252 = vpack.c.bf16 %v236, %v236
        %v253 = vpack.c.bf16 %v237, %v237
        %v254 = vpack.c.bf16 %v238, %v238
        %v255 = vpack.c.bf16 %v239, %v239
        %v256 = vpack.c.bf16 %v240, %v240
        %v257 = vpack.c.bf16 %v241, %v241
        %v258 = vunpack.c.l.bf16 %v242
        %v259 = vunpack.c.l.bf16 %v243
        %v260 = vunpack.c.l.bf16 %v244
        %v261 = vunpack.c.l.bf16 %v245
        %v262 = vunpack.c.l.bf16 %v246
        %v263 = vunpack.c.l.bf16 %v247
        %v264 = vunpack.c.l.bf16 %v248
        %v265 = vunpack.c.l.bf16 %v249
        %v266 = vunpack.c.l.bf16 %v250
        %v267 = vunpack.c.l.bf16 %v251
        %v268 = vunpack.c.l.bf16 %v252
        %v269 = vunpack.c.l.bf16 %v253
        %v270 = vunpack.c.l.bf16 %v254
        %v271 = vunpack.c.l.bf16 %v255
        %v272 = vunpack.c.l.bf16 %v256
        %v273 = vunpack.c.l.bf16 %v257
        %v274 = vmax.f32 %v258, 0.0
        %v275 = vmax.f32 %v259, 0.0
        %v276 = vmax.f32 %v260, 0.0
        %v277 = vmax.f32 %v261, 0.0
        %v278 = vmax.f32 %v262, 0.0
        %v279 = vmax.f32 %v263, 0.0
        %v280 = vmax.f32 %v264, 0.0
        %v281 = vmax.f32 %v265, 0.0
        %v282 = vmax.f32 %v266, 0.0
        %v283 = vmax.f32 %v267, 0.0
        %v284 = vmax.f32 %v268, 0.0
        %v285 = vmax.f32 %v269, 0.0
        %v286 = vmax.f32 %v270, 0.0
        %v287 = vmax.f32 %v271, 0.0
        %v288 = vmax.f32 %v272, 0.0
        %v289 = vmax.f32 %v273, 0.0
        %v290 = vpack.c.bf16 %v275, %v274
        %v291 = vpack.c.bf16 %v277, %v276
        %v292 = vpack.c.bf16 %v279, %v278
        %v293 = vpack.c.bf16 %v281, %v280
        %v294 = vpack.c.bf16 %v283, %v282
        %v295 = vpack.c.bf16 %v285, %v284
        %v296 = vpack.c.bf16 %v287, %v286
        %v297 = vpack.c.bf16 %v289, %v288
        %v298 = vld [vmem:[#allocation5] sm:$0xf]
        %v299 = vld [vmem:[#allocation5 + $0x4] sm:$0xf]
        %v300 = vld [vmem:[#allocation5 + $0x8] sm:$0xf]
        %v301 = vld [vmem:[#allocation5 + $0xc] sm:$0xf]
        %v302 = vld [vmem:[#allocation5 + $0x10] sm:$0xf]
        %v303 = vld [vmem:[#allocation5 + $0x14] sm:$0xf]
        %v304 = vld [vmem:[#allocation5 + $0x18] sm:$0xf]
        %v305 = vld [vmem:[#allocation5 + $0x1c] sm:$0xf]
        %v306 = vld [vmem:[#allocation5 + $0x20] sm:$0xf]
        %v307 = vld [vmem:[#allocation5 + $0x24] sm:$0xf]
        %v308 = vld [vmem:[#allocation5 + $0x28] sm:$0xf]
        %v309 = vld [vmem:[#allocation5 + $0x2c] sm:$0xf]
        %v310 = vld [vmem:[#allocation5 + $0x30] sm:$0xf]
        %v311 = vld [vmem:[#allocation5 + $0x34] sm:$0xf]
        %v312 = vld [vmem:[#allocation5 + $0x38] sm:$0xf]
        %v313 = vld [vmem:[#allocation5 + $0x3c] sm:$0xf]
        %v314 = vld [vmem:[#allocation7] sm:$0x1]
        %v316 = vperm.slane %v314, 0
        %v334 = vunpack.c.l.b16 %v298
        %v335 = vunpack.c.l.b16 %v299
        %v336 = vunpack.c.l.b16 %v300
        %v337 = vunpack.c.l.b16 %v301
        %v338 = vunpack.c.l.b16 %v302
        %v339 = vunpack.c.l.b16 %v303
        %v340 = vunpack.c.l.b16 %v304
        %v341 = vunpack.c.l.b16 %v305
        %v342 = vunpack.c.l.b16 %v306
        %v343 = vunpack.c.l.b16 %v307
        %v344 = vunpack.c.l.b16 %v308
        %v345 = vunpack.c.l.b16 %v309
        %v346 = vunpack.c.l.b16 %v310
        %v347 = vunpack.c.l.b16 %v311
        %v348 = vunpack.c.l.b16 %v312
        %v349 = vunpack.c.l.b16 %v313
        %v350 = vpack.c.b16 %v335, %v334
        %v351 = vpack.c.b16 %v337, %v336
        %v352 = vpack.c.b16 %v339, %v338
        %v353 = vpack.c.b16 %v341, %v340
        %v354 = vpack.c.b16 %v343, %v342
        %v355 = vpack.c.b16 %v345, %v344
        %v356 = vpack.c.b16 %v347, %v346
        %v357 = vpack.c.b16 %v349, %v348
        %366 = vmatpush.bf16.msra.mxu0 %v357
        %367 = vmatpush.bf16.msra.mxu0 %v356
        %368 = vmatpush.bf16.msra.mxu0 %v355
        %369 = vmatpush.bf16.msra.mxu0 %v354
        %370 = vmatpush.bf16.msra.mxu0 %v353
        %371 = vmatpush.bf16.msra.mxu0 %v352
        %372 = vmatpush.bf16.msra.mxu0 %v351
        %373 = vmatpush.bf16.msra.mxu0 %v350
        %374 = vmatmul.bf16.gmra.mxu0 %v290
        %v375 = vpop.f32.mrf.mxu0
        %v376 = vadd.f32 %v316, %v375
        %v377 = vpop.f32.mrf.mxu0
        %v378 = vadd.f32 %v316, %v377
        %379 = vmatmul.bf16.gmra.mxu0 %v291
        %v380 = vpop.f32.mrf.mxu0
        %v381 = vadd.f32 %v316, %v380
        %v382 = vpop.f32.mrf.mxu0
        %v383 = vadd.f32 %v316, %v382
        %384 = vmatmul.bf16.gmra.mxu0 %v292
        %v385 = vpop.f32.mrf.mxu0
        %v386 = vadd.f32 %v316, %v385
        %v387 = vpop.f32.mrf.mxu0
        %v388 = vadd.f32 %v316, %v387
        %389 = vmatmul.bf16.gmra.mxu0 %v293
        %v390 = vpop.f32.mrf.mxu0
        %v391 = vadd.f32 %v316, %v390
        %v392 = vpop.f32.mrf.mxu0
        %v393 = vadd.f32 %v316, %v392
        %394 = vmatmul.bf16.gmra.mxu0 %v294
        %v395 = vpop.f32.mrf.mxu0
        %v396 = vadd.f32 %v316, %v395
        %v397 = vpop.f32.mrf.mxu0
        %v398 = vadd.f32 %v316, %v397
        %399 = vmatmul.bf16.gmra.mxu0 %v295
        %v400 = vpop.f32.mrf.mxu0
        %v401 = vadd.f32 %v316, %v400
        %v402 = vpop.f32.mrf.mxu0
        %v403 = vadd.f32 %v316, %v402
        %404 = vmatmul.bf16.gmra.mxu0 %v296
        %v405 = vpop.f32.mrf.mxu0
        %v406 = vadd.f32 %v316, %v405
        %v407 = vpop.f32.mrf.mxu0
        %v408 = vadd.f32 %v316, %v407
        %409 = vmatmul.bf16.gmra.mxu0 %v297
        %v410 = vpop.f32.mrf.mxu0
        %v411 = vadd.f32 %v316, %v410
        %v412 = vpop.f32.mrf.mxu0
        %v413 = vadd.f32 %v316, %v412
        %414 = vdwg.mxu0
        %v415 = vpack.c.bf16 %v376, %v376
        %v416 = vpack.c.bf16 %v378, %v378
        %v417 = vpack.c.bf16 %v381, %v381
        %v418 = vpack.c.bf16 %v383, %v383
        %v419 = vpack.c.bf16 %v386, %v386
        %v420 = vpack.c.bf16 %v388, %v388
        %v421 = vpack.c.bf16 %v391, %v391
        %v422 = vpack.c.bf16 %v393, %v393
        %v423 = vpack.c.bf16 %v396, %v396
        %v424 = vpack.c.bf16 %v398, %v398
        %v425 = vpack.c.bf16 %v401, %v401
        %v426 = vpack.c.bf16 %v403, %v403
        %v427 = vpack.c.bf16 %v406, %v406
        %v428 = vpack.c.bf16 %v408, %v408
        %v429 = vpack.c.bf16 %v411, %v411
        %v430 = vpack.c.bf16 %v413, %v413
        %v431 = vunpack.c.l.bf16 %v415
        %v432 = vunpack.c.l.bf16 %v416
        %v433 = vunpack.c.l.bf16 %v417
        %v434 = vunpack.c.l.bf16 %v418
        %v435 = vunpack.c.l.bf16 %v419
        %v436 = vunpack.c.l.bf16 %v420
        %v437 = vunpack.c.l.bf16 %v421
        %v438 = vunpack.c.l.bf16 %v422
        %v439 = vunpack.c.l.bf16 %v423
        %v440 = vunpack.c.l.bf16 %v424
        %v441 = vunpack.c.l.bf16 %v425
        %v442 = vunpack.c.l.bf16 %v426
        %v443 = vunpack.c.l.bf16 %v427
        %v444 = vunpack.c.l.bf16 %v428
        %v445 = vunpack.c.l.bf16 %v429
        %v446 = vunpack.c.l.bf16 %v430
        %v447 = vmax.f32 %v431, 0.0
        %v448 = vmax.f32 %v432, 0.0
        %v449 = vmax.f32 %v433, 0.0
        %v450 = vmax.f32 %v434, 0.0
        %v451 = vmax.f32 %v435, 0.0
        %v452 = vmax.f32 %v436, 0.0
        %v453 = vmax.f32 %v437, 0.0
        %v454 = vmax.f32 %v438, 0.0
        %v455 = vmax.f32 %v439, 0.0
        %v456 = vmax.f32 %v440, 0.0
        %v457 = vmax.f32 %v441, 0.0
        %v458 = vmax.f32 %v442, 0.0
        %v459 = vmax.f32 %v443, 0.0
        %v460 = vmax.f32 %v444, 0.0
        %v461 = vmax.f32 %v445, 0.0
        %v462 = vmax.f32 %v446, 0.0
        %v463 = vpack.c.bf16 %v448, %v447
        %v464 = vpack.c.bf16 %v450, %v449
        %v465 = vpack.c.bf16 %v452, %v451
        %v466 = vpack.c.bf16 %v454, %v453
        %v467 = vpack.c.bf16 %v456, %v455
        %v468 = vpack.c.bf16 %v458, %v457
        %v469 = vpack.c.bf16 %v460, %v459
        %v470 = vpack.c.bf16 %v462, %v461
        %s471 = scalar_lea.vmem [#allocation5], 64
        %v472 = vld [vmem:[%s471] sm:$0xf]
        %v473 = vld [vmem:[%s471 + $0x4] sm:$0xf]
        %v474 = vld [vmem:[%s471 + $0x8] sm:$0xf]
        %v475 = vld [vmem:[%s471 + $0xc] sm:$0xf]
        %v476 = vld [vmem:[%s471 + $0x10] sm:$0xf]
        %v477 = vld [vmem:[%s471 + $0x14] sm:$0xf]
        %v478 = vld [vmem:[%s471 + $0x18] sm:$0xf]
        %v479 = vld [vmem:[%s471 + $0x1c] sm:$0xf]
        %v480 = vld [vmem:[%s471 + $0x20] sm:$0xf]
        %v481 = vld [vmem:[%s471 + $0x24] sm:$0xf]
        %v482 = vld [vmem:[%s471 + $0x28] sm:$0xf]
        %v483 = vld [vmem:[%s471 + $0x2c] sm:$0xf]
        %v484 = vld [vmem:[%s471 + $0x30] sm:$0xf]
        %v485 = vld [vmem:[%s471 + $0x34] sm:$0xf]
        %v486 = vld [vmem:[%s471 + $0x38] sm:$0xf]
        %v487 = vld [vmem:[%s471 + $0x3c] sm:$0xf]
        %s488 = scalar_lea.vmem [#allocation7], 1
        %v489 = vld [vmem:[%s488] sm:$0x1]
        %v491 = vperm.slane %v489, 0
        %v509 = vunpack.c.l.b16 %v472
        %v510 = vunpack.c.l.b16 %v473
        %v511 = vunpack.c.l.b16 %v474
        %v512 = vunpack.c.l.b16 %v475
        %v513 = vunpack.c.l.b16 %v476
        %v514 = vunpack.c.l.b16 %v477
        %v515 = vunpack.c.l.b16 %v478
        %v516 = vunpack.c.l.b16 %v479
        %v517 = vunpack.c.l.b16 %v480
        %v518 = vunpack.c.l.b16 %v481
        %v519 = vunpack.c.l.b16 %v482
        %v520 = vunpack.c.l.b16 %v483
        %v521 = vunpack.c.l.b16 %v484
        %v522 = vunpack.c.l.b16 %v485
        %v523 = vunpack.c.l.b16 %v486
        %v524 = vunpack.c.l.b16 %v487
        %v525 = vpack.c.b16 %v510, %v509
        %v526 = vpack.c.b16 %v512, %v511
        %v527 = vpack.c.b16 %v514, %v513
        %v528 = vpack.c.b16 %v516, %v515
        %v529 = vpack.c.b16 %v518, %v517
        %v530 = vpack.c.b16 %v520, %v519
        %v531 = vpack.c.b16 %v522, %v521
        %v532 = vpack.c.b16 %v524, %v523
        %541 = vmatpush.bf16.msra.mxu0 %v532
        %542 = vmatpush.bf16.msra.mxu0 %v531
        %543 = vmatpush.bf16.msra.mxu0 %v530
        %544 = vmatpush.bf16.msra.mxu0 %v529
        %545 = vmatpush.bf16.msra.mxu0 %v528
        %546 = vmatpush.bf16.msra.mxu0 %v527
        %547 = vmatpush.bf16.msra.mxu0 %v526
        %548 = vmatpush.bf16.msra.mxu0 %v525
        %549 = vmatmul.bf16.gmra.mxu0 %v463
        %v550 = vpop.f32.mrf.mxu0
        %v551 = vadd.f32 %v491, %v550
        %v552 = vpop.f32.mrf.mxu0
        %v553 = vadd.f32 %v491, %v552
        %554 = vmatmul.bf16.gmra.mxu0 %v464
        %v555 = vpop.f32.mrf.mxu0
        %v556 = vadd.f32 %v491, %v555
        %v557 = vpop.f32.mrf.mxu0
        %v558 = vadd.f32 %v491, %v557
        %559 = vmatmul.bf16.gmra.mxu0 %v465
        %v560 = vpop.f32.mrf.mxu0
        %v561 = vadd.f32 %v491, %v560
        %v562 = vpop.f32.mrf.mxu0
        %v563 = vadd.f32 %v491, %v562
        %564 = vmatmul.bf16.gmra.mxu0 %v466
        %v565 = vpop.f32.mrf.mxu0
        %v566 = vadd.f32 %v491, %v565
        %v567 = vpop.f32.mrf.mxu0
        %v568 = vadd.f32 %v491, %v567
        %569 = vmatmul.bf16.gmra.mxu0 %v467
        %v570 = vpop.f32.mrf.mxu0
        %v571 = vadd.f32 %v491, %v570
        %v572 = vpop.f32.mrf.mxu0
        %v573 = vadd.f32 %v491, %v572
        %574 = vmatmul.bf16.gmra.mxu0 %v468
        %v575 = vpop.f32.mrf.mxu0
        %v576 = vadd.f32 %v491, %v575
        %v577 = vpop.f32.mrf.mxu0
        %v578 = vadd.f32 %v491, %v577
        %579 = vmatmul.bf16.gmra.mxu0 %v469
        %v580 = vpop.f32.mrf.mxu0
        %v581 = vadd.f32 %v491, %v580
        %v582 = vpop.f32.mrf.mxu0
        %v583 = vadd.f32 %v491, %v582
        %584 = vmatmul.bf16.gmra.mxu0 %v470
        %v585 = vpop.f32.mrf.mxu0
        %v586 = vadd.f32 %v491, %v585
        %v587 = vpop.f32.mrf.mxu0
        %v588 = vadd.f32 %v491, %v587
        %589 = vdwg.mxu0
        %v590 = vadd.f32 %v226, %v551
        %v591 = vadd.f32 %v227, %v553
        %v592 = vadd.f32 %v228, %v556
        %v593 = vadd.f32 %v229, %v558
        %v594 = vadd.f32 %v230, %v561
        %v595 = vadd.f32 %v231, %v563
        %v596 = vadd.f32 %v232, %v566
        %v597 = vadd.f32 %v233, %v568
        %v598 = vadd.f32 %v234, %v571
        %v599 = vadd.f32 %v235, %v573
        %v600 = vadd.f32 %v236, %v576
        %v601 = vadd.f32 %v237, %v578
        %v602 = vadd.f32 %v238, %v581
        %v603 = vadd.f32 %v239, %v583
        %v604 = vadd.f32 %v240, %v586
        %v605 = vadd.f32 %v241, %v588
        %v606 = vpack.c.bf16 %v590, %v590
        %v607 = vpack.c.bf16 %v591, %v591
        %v608 = vpack.c.bf16 %v592, %v592
        %v609 = vpack.c.bf16 %v593, %v593
        %v610 = vpack.c.bf16 %v594, %v594
        %v611 = vpack.c.bf16 %v595, %v595
        %v612 = vpack.c.bf16 %v596, %v596
        %v613 = vpack.c.bf16 %v597, %v597
        %v614 = vpack.c.bf16 %v598, %v598
        %v615 = vpack.c.bf16 %v599, %v599
        %v616 = vpack.c.bf16 %v600, %v600
        %v617 = vpack.c.bf16 %v601, %v601
        %v618 = vpack.c.bf16 %v602, %v602
        %v619 = vpack.c.bf16 %v603, %v603
        %v620 = vpack.c.bf16 %v604, %v604
        %v621 = vpack.c.bf16 %v605, %v605
        %v622 = vunpack.c.l.bf16 %v606
        %v623 = vunpack.c.l.bf16 %v607
        %v624 = vunpack.c.l.bf16 %v608
        %v625 = vunpack.c.l.bf16 %v609
        %v626 = vunpack.c.l.bf16 %v610
        %v627 = vunpack.c.l.bf16 %v611
        %v628 = vunpack.c.l.bf16 %v612
        %v629 = vunpack.c.l.bf16 %v613
        %v630 = vunpack.c.l.bf16 %v614
        %v631 = vunpack.c.l.bf16 %v615
        %v632 = vunpack.c.l.bf16 %v616
        %v633 = vunpack.c.l.bf16 %v617
        %v634 = vunpack.c.l.bf16 %v618
        %v635 = vunpack.c.l.bf16 %v619
        %v636 = vunpack.c.l.bf16 %v620
        %v637 = vunpack.c.l.bf16 %v621
        %v638 = vmax.f32 %v622, 0.0
        %v639 = vmax.f32 %v623, 0.0
        %v640 = vmax.f32 %v624, 0.0
        %v641 = vmax.f32 %v625, 0.0
        %v642 = vmax.f32 %v626, 0.0
        %v643 = vmax.f32 %v627, 0.0
        %v644 = vmax.f32 %v628, 0.0
        %v645 = vmax.f32 %v629, 0.0
        %v646 = vmax.f32 %v630, 0.0
        %v647 = vmax.f32 %v631, 0.0
        %v648 = vmax.f32 %v632, 0.0
        %v649 = vmax.f32 %v633, 0.0
        %v650 = vmax.f32 %v634, 0.0
        %v651 = vmax.f32 %v635, 0.0
        %v652 = vmax.f32 %v636, 0.0
        %v653 = vmax.f32 %v637, 0.0
        %v654 = vpack.c.bf16 %v639, %v638
        %v655 = vpack.c.bf16 %v641, %v640
        %v656 = vpack.c.bf16 %v643, %v642
        %v657 = vpack.c.bf16 %v645, %v644
        %v658 = vpack.c.bf16 %v647, %v646
        %v659 = vpack.c.bf16 %v649, %v648
        %v660 = vpack.c.bf16 %v651, %v650
        %v661 = vpack.c.bf16 %v653, %v652
        %s662 = scalar_lea.vmem [#allocation5], 128
        %v663 = vld [vmem:[%s662] sm:$0xf]
        %v664 = vld [vmem:[%s662 + $0x4] sm:$0xf]
        %v665 = vld [vmem:[%s662 + $0x8] sm:$0xf]
        %v666 = vld [vmem:[%s662 + $0xc] sm:$0xf]
        %v667 = vld [vmem:[%s662 + $0x10] sm:$0xf]
        %v668 = vld [vmem:[%s662 + $0x14] sm:$0xf]
        %v669 = vld [vmem:[%s662 + $0x18] sm:$0xf]
        %v670 = vld [vmem:[%s662 + $0x1c] sm:$0xf]
        %v671 = vld [vmem:[%s662 + $0x20] sm:$0xf]
        %v672 = vld [vmem:[%s662 + $0x24] sm:$0xf]
        %v673 = vld [vmem:[%s662 + $0x28] sm:$0xf]
        %v674 = vld [vmem:[%s662 + $0x2c] sm:$0xf]
        %v675 = vld [vmem:[%s662 + $0x30] sm:$0xf]
        %v676 = vld [vmem:[%s662 + $0x34] sm:$0xf]
        %v677 = vld [vmem:[%s662 + $0x38] sm:$0xf]
        %v678 = vld [vmem:[%s662 + $0x3c] sm:$0xf]
        %s679 = scalar_lea.vmem [#allocation7], 2
        %v680 = vld [vmem:[%s679] sm:$0x1]
        %v682 = vperm.slane %v680, 0
        %v700 = vunpack.c.l.b16 %v663
        %v701 = vunpack.c.l.b16 %v664
        %v702 = vunpack.c.l.b16 %v665
        %v703 = vunpack.c.l.b16 %v666
        %v704 = vunpack.c.l.b16 %v667
        %v705 = vunpack.c.l.b16 %v668
        %v706 = vunpack.c.l.b16 %v669
        %v707 = vunpack.c.l.b16 %v670
        %v708 = vunpack.c.l.b16 %v671
        %v709 = vunpack.c.l.b16 %v672
        %v710 = vunpack.c.l.b16 %v673
        %v711 = vunpack.c.l.b16 %v674
        %v712 = vunpack.c.l.b16 %v675
        %v713 = vunpack.c.l.b16 %v676
        %v714 = vunpack.c.l.b16 %v677
        %v715 = vunpack.c.l.b16 %v678
        %v716 = vpack.c.b16 %v701, %v700
        %v717 = vpack.c.b16 %v703, %v702
        %v718 = vpack.c.b16 %v705, %v704
        %v719 = vpack.c.b16 %v707, %v706
        %v720 = vpack.c.b16 %v709, %v708
        %v721 = vpack.c.b16 %v711, %v710
        %v722 = vpack.c.b16 %v713, %v712
        %v723 = vpack.c.b16 %v715, %v714
        %732 = vmatpush.bf16.msra.mxu0 %v723
        %733 = vmatpush.bf16.msra.mxu0 %v722
        %734 = vmatpush.bf16.msra.mxu0 %v721
        %735 = vmatpush.bf16.msra.mxu0 %v720
        %736 = vmatpush.bf16.msra.mxu0 %v719
        %737 = vmatpush.bf16.msra.mxu0 %v718
        %738 = vmatpush.bf16.msra.mxu0 %v717
        %739 = vmatpush.bf16.msra.mxu0 %v716
        %740 = vmatmul.bf16.gmra.mxu0 %v654
        %v741 = vpop.f32.mrf.mxu0
        %v742 = vadd.f32 %v682, %v741
        %v743 = vpop.f32.mrf.mxu0
        %v744 = vadd.f32 %v682, %v743
        %745 = vmatmul.bf16.gmra.mxu0 %v655
        %v746 = vpop.f32.mrf.mxu0
        %v747 = vadd.f32 %v682, %v746
        %v748 = vpop.f32.mrf.mxu0
        %v749 = vadd.f32 %v682, %v748
        %750 = vmatmul.bf16.gmra.mxu0 %v656
        %v751 = vpop.f32.mrf.mxu0
        %v752 = vadd.f32 %v682, %v751
        %v753 = vpop.f32.mrf.mxu0
        %v754 = vadd.f32 %v682, %v753
        %755 = vmatmul.bf16.gmra.mxu0 %v657
        %v756 = vpop.f32.mrf.mxu0
        %v757 = vadd.f32 %v682, %v756
        %v758 = vpop.f32.mrf.mxu0
        %v759 = vadd.f32 %v682, %v758
        %760 = vmatmul.bf16.gmra.mxu0 %v658
        %v761 = vpop.f32.mrf.mxu0
        %v762 = vadd.f32 %v682, %v761
        %v763 = vpop.f32.mrf.mxu0
        %v764 = vadd.f32 %v682, %v763
        %765 = vmatmul.bf16.gmra.mxu0 %v659
        %v766 = vpop.f32.mrf.mxu0
        %v767 = vadd.f32 %v682, %v766
        %v768 = vpop.f32.mrf.mxu0
        %v769 = vadd.f32 %v682, %v768
        %770 = vmatmul.bf16.gmra.mxu0 %v660
        %v771 = vpop.f32.mrf.mxu0
        %v772 = vadd.f32 %v682, %v771
        %v773 = vpop.f32.mrf.mxu0
        %v774 = vadd.f32 %v682, %v773
        %775 = vmatmul.bf16.gmra.mxu0 %v661
        %v776 = vpop.f32.mrf.mxu0
        %v777 = vadd.f32 %v682, %v776
        %v778 = vpop.f32.mrf.mxu0
        %v779 = vadd.f32 %v682, %v778
        %780 = vdwg.mxu0
        %v781 = vpack.c.bf16 %v742, %v742
        %v782 = vpack.c.bf16 %v744, %v744
        %v783 = vpack.c.bf16 %v747, %v747
        %v784 = vpack.c.bf16 %v749, %v749
        %v785 = vpack.c.bf16 %v752, %v752
        %v786 = vpack.c.bf16 %v754, %v754
        %v787 = vpack.c.bf16 %v757, %v757
        %v788 = vpack.c.bf16 %v759, %v759
        %v789 = vpack.c.bf16 %v762, %v762
        %v790 = vpack.c.bf16 %v764, %v764
        %v791 = vpack.c.bf16 %v767, %v767
        %v792 = vpack.c.bf16 %v769, %v769
        %v793 = vpack.c.bf16 %v772, %v772
        %v794 = vpack.c.bf16 %v774, %v774
        %v795 = vpack.c.bf16 %v777, %v777
        %v796 = vpack.c.bf16 %v779, %v779
        %v797 = vunpack.c.l.bf16 %v781
        %v798 = vunpack.c.l.bf16 %v782
        %v799 = vunpack.c.l.bf16 %v783
        %v800 = vunpack.c.l.bf16 %v784
        %v801 = vunpack.c.l.bf16 %v785
        %v802 = vunpack.c.l.bf16 %v786
        %v803 = vunpack.c.l.bf16 %v787
        %v804 = vunpack.c.l.bf16 %v788
        %v805 = vunpack.c.l.bf16 %v789
        %v806 = vunpack.c.l.bf16 %v790
        %v807 = vunpack.c.l.bf16 %v791
        %v808 = vunpack.c.l.bf16 %v792
        %v809 = vunpack.c.l.bf16 %v793
        %v810 = vunpack.c.l.bf16 %v794
        %v811 = vunpack.c.l.bf16 %v795
        %v812 = vunpack.c.l.bf16 %v796
        %v813 = vmax.f32 %v797, 0.0
        %v814 = vmax.f32 %v798, 0.0
        %v815 = vmax.f32 %v799, 0.0
        %v816 = vmax.f32 %v800, 0.0
        %v817 = vmax.f32 %v801, 0.0
        %v818 = vmax.f32 %v802, 0.0
        %v819 = vmax.f32 %v803, 0.0
        %v820 = vmax.f32 %v804, 0.0
        %v821 = vmax.f32 %v805, 0.0
        %v822 = vmax.f32 %v806, 0.0
        %v823 = vmax.f32 %v807, 0.0
        %v824 = vmax.f32 %v808, 0.0
        %v825 = vmax.f32 %v809, 0.0
        %v826 = vmax.f32 %v810, 0.0
        %v827 = vmax.f32 %v811, 0.0
        %v828 = vmax.f32 %v812, 0.0
        %v829 = vpack.c.bf16 %v814, %v813
        %v830 = vpack.c.bf16 %v816, %v815
        %v831 = vpack.c.bf16 %v818, %v817
        %v832 = vpack.c.bf16 %v820, %v819
        %v833 = vpack.c.bf16 %v822, %v821
        %v834 = vpack.c.bf16 %v824, %v823
        %v835 = vpack.c.bf16 %v826, %v825
        %v836 = vpack.c.bf16 %v828, %v827
        %s837 = scalar_lea.vmem [#allocation5], 192
        %v838 = vld [vmem:[%s837] sm:$0xf]
        %v839 = vld [vmem:[%s837 + $0x4] sm:$0xf]
        %v840 = vld [vmem:[%s837 + $0x8] sm:$0xf]
        %v841 = vld [vmem:[%s837 + $0xc] sm:$0xf]
        %v842 = vld [vmem:[%s837 + $0x10] sm:$0xf]
        %v843 = vld [vmem:[%s837 + $0x14] sm:$0xf]
        %v844 = vld [vmem:[%s837 + $0x18] sm:$0xf]
        %v845 = vld [vmem:[%s837 + $0x1c] sm:$0xf]
        %v846 = vld [vmem:[%s837 + $0x20] sm:$0xf]
        %v847 = vld [vmem:[%s837 + $0x24] sm:$0xf]
        %v848 = vld [vmem:[%s837 + $0x28] sm:$0xf]
        %v849 = vld [vmem:[%s837 + $0x2c] sm:$0xf]
        %v850 = vld [vmem:[%s837 + $0x30] sm:$0xf]
        %v851 = vld [vmem:[%s837 + $0x34] sm:$0xf]
        %v852 = vld [vmem:[%s837 + $0x38] sm:$0xf]
        %v853 = vld [vmem:[%s837 + $0x3c] sm:$0xf]
        %s854 = scalar_lea.vmem [#allocation7], 3
        %v855 = vld [vmem:[%s854] sm:$0x1]
        %v857 = vperm.slane %v855, 0
        %v875 = vunpack.c.l.b16 %v838
        %v876 = vunpack.c.l.b16 %v839
        %v877 = vunpack.c.l.b16 %v840
        %v878 = vunpack.c.l.b16 %v841
        %v879 = vunpack.c.l.b16 %v842
        %v880 = vunpack.c.l.b16 %v843
        %v881 = vunpack.c.l.b16 %v844
        %v882 = vunpack.c.l.b16 %v845
        %v883 = vunpack.c.l.b16 %v846
        %v884 = vunpack.c.l.b16 %v847
        %v885 = vunpack.c.l.b16 %v848
        %v886 = vunpack.c.l.b16 %v849
        %v887 = vunpack.c.l.b16 %v850
        %v888 = vunpack.c.l.b16 %v851
        %v889 = vunpack.c.l.b16 %v852
        %v890 = vunpack.c.l.b16 %v853
        %v891 = vpack.c.b16 %v876, %v875
        %v892 = vpack.c.b16 %v878, %v877
        %v893 = vpack.c.b16 %v880, %v879
        %v894 = vpack.c.b16 %v882, %v881
        %v895 = vpack.c.b16 %v884, %v883
        %v896 = vpack.c.b16 %v886, %v885
        %v897 = vpack.c.b16 %v888, %v887
        %v898 = vpack.c.b16 %v890, %v889
        %907 = vmatpush.bf16.msra.mxu0 %v898
        %908 = vmatpush.bf16.msra.mxu0 %v897
        %909 = vmatpush.bf16.msra.mxu0 %v896
        %910 = vmatpush.bf16.msra.mxu0 %v895
        %911 = vmatpush.bf16.msra.mxu0 %v894
        %912 = vmatpush.bf16.msra.mxu0 %v893
        %913 = vmatpush.bf16.msra.mxu0 %v892
        %914 = vmatpush.bf16.msra.mxu0 %v891
        %915 = vmatmul.bf16.gmra.mxu0 %v829
        %v916 = vpop.f32.mrf.mxu0
        %v917 = vadd.f32 %v857, %v916
        %v918 = vpop.f32.mrf.mxu0
        %v919 = vadd.f32 %v857, %v918
        %920 = vmatmul.bf16.gmra.mxu0 %v830
        %v921 = vpop.f32.mrf.mxu0
        %v922 = vadd.f32 %v857, %v921
        %v923 = vpop.f32.mrf.mxu0
        %v924 = vadd.f32 %v857, %v923
        %925 = vmatmul.bf16.gmra.mxu0 %v831
        %v926 = vpop.f32.mrf.mxu0
        %v927 = vadd.f32 %v857, %v926
        %v928 = vpop.f32.mrf.mxu0
        %v929 = vadd.f32 %v857, %v928
        %930 = vmatmul.bf16.gmra.mxu0 %v832
        %v931 = vpop.f32.mrf.mxu0
        %v932 = vadd.f32 %v857, %v931
        %v933 = vpop.f32.mrf.mxu0
        %v934 = vadd.f32 %v857, %v933
        %935 = vmatmul.bf16.gmra.mxu0 %v833
        %v936 = vpop.f32.mrf.mxu0
        %v937 = vadd.f32 %v857, %v936
        %v938 = vpop.f32.mrf.mxu0
        %v939 = vadd.f32 %v857, %v938
        %940 = vmatmul.bf16.gmra.mxu0 %v834
        %v941 = vpop.f32.mrf.mxu0
        %v942 = vadd.f32 %v857, %v941
        %v943 = vpop.f32.mrf.mxu0
        %v944 = vadd.f32 %v857, %v943
        %945 = vmatmul.bf16.gmra.mxu0 %v835
        %v946 = vpop.f32.mrf.mxu0
        %v947 = vadd.f32 %v857, %v946
        %v948 = vpop.f32.mrf.mxu0
        %v949 = vadd.f32 %v857, %v948
        %950 = vmatmul.bf16.gmra.mxu0 %v836
        %v951 = vpop.f32.mrf.mxu0
        %v952 = vadd.f32 %v857, %v951
        %v953 = vpop.f32.mrf.mxu0
        %v954 = vadd.f32 %v857, %v953
        %955 = vdwg.mxu0
        %v956 = vadd.f32 %v590, %v917
        %v957 = vadd.f32 %v591, %v919
        %v958 = vadd.f32 %v592, %v922
        %v959 = vadd.f32 %v593, %v924
        %v960 = vadd.f32 %v594, %v927
        %v961 = vadd.f32 %v595, %v929
        %v962 = vadd.f32 %v596, %v932
        %v963 = vadd.f32 %v597, %v934
        %v964 = vadd.f32 %v598, %v937
        %v965 = vadd.f32 %v599, %v939
        %v966 = vadd.f32 %v600, %v942
        %v967 = vadd.f32 %v601, %v944
        %v968 = vadd.f32 %v602, %v947
        %v969 = vadd.f32 %v603, %v949
        %v970 = vadd.f32 %v604, %v952
        %v971 = vadd.f32 %v605, %v954
        %972 = vst [vmem:[%s223] sm:$0xff] %v956
        %973 = vst [vmem:[%s223 + $0x8] sm:$0xff] %v957
        %974 = vst [vmem:[%s223 + $0x10] sm:$0xff] %v958
        %975 = vst [vmem:[%s223 + $0x18] sm:$0xff] %v959
        %976 = vst [vmem:[%s223 + $0x20] sm:$0xff] %v960
        %977 = vst [vmem:[%s223 + $0x28] sm:$0xff] %v961
        %978 = vst [vmem:[%s223 + $0x30] sm:$0xff] %v962
        %979 = vst [vmem:[%s223 + $0x38] sm:$0xff] %v963
        %980 = vst [vmem:[%s223 + $0x40] sm:$0xff] %v964
        %981 = vst [vmem:[%s223 + $0x48] sm:$0xff] %v965
        %982 = vst [vmem:[%s223 + $0x50] sm:$0xff] %v966
        %983 = vst [vmem:[%s223 + $0x58] sm:$0xff] %v967
        %984 = vst [vmem:[%s223 + $0x60] sm:$0xff] %v968
        %985 = vst [vmem:[%s223 + $0x68] sm:$0xff] %v969
        %986 = vst [vmem:[%s223 + $0x70] sm:$0xff] %v970
        %987 = vst [vmem:[%s223 + $0x78] sm:$0xff] %v971
        %s988 = sand.u32 %s97, 1
        %s989 = scalar_lea.sflag [#allocation4], %s988
        %s990 = sand.u32 %s97, 1
        %s991 = smul.addr %s990, 128
        %s992 = scalar_lea.vmem [#allocation8], %s991
        // Predicated region
        $region45: #{resblocks_forward.1} parent=31 // pred_check
          %p993 = pneg %p107
        $region46: #{resblocks_forward.1} parent=31 // pred_check_branch
          %995 = sbr.rel (%p993) target = $region48
        $region47: #{resblocks_forward.1} parent=31 // pred_region
          %s996 = smul.u32 16, %s21
          %998 = vsyncadd %s989, 0
          %s999 = smul.addr %s996, 8
          %s1000 = scalar_lea.hbm %s3, %s999
          %s1001 = sshll.u32 %s992, 4
          %s1002 = int_to_ptr.vmem [resolvable:$true] %s1001
          %s1003 = sshll.u32 %s1000, 4
          %s1004 = int_to_ptr.hbm [resolvable:$true] %s1003
          %1009 = dma.vmem_to_hbm [thread:$0]  %s1002, 2048, %s1004, %s989, 128, 128, 8
        $region48: #{resblocks_forward.1} parent=31 // pred_fallthru
          _
      $region32: #{resblocks_forward.1} parent=5 // pred_fallthru
        _
      %p1010 = scmp.le.s32.totalorder 2, %s16
      // Predicated region
      $region49: #{resblocks_forward.1} parent=5 // pred_check
        %p1011 = pneg %p1010
      $region50: #{resblocks_forward.1} parent=5 // pred_check_branch
        %1013 = sbr.rel (%p1011) target = $region52
      $region51: #{resblocks_forward.1} parent=5 // pred_region
        %s1014 = ssub.s32 %s16, 2
        // Predicated region
        $region53: #{resblocks_forward.1} parent=51 // pred_check
          %p1015 = pneg %p113
        $region54: #{resblocks_forward.1} parent=51 // pred_check_branch
          %1017 = sbr.rel (%p1015) target = $region56
        $region55: #{resblocks_forward.1} parent=51 // pred_region
          %s1018 = sand.u32 %s98, 1
          %s1019 = scalar_lea.sflag [#allocation4], %s1018
          %s1020 = sand.u32 %s98, 1
          %s1021 = smul.addr %s1020, 128
          %s1022 = scalar_lea.vmem [#allocation8], %s1021
          %1024 = dma.done %s1019, 2048
        $region56: #{resblocks_forward.1} parent=51 // pred_fallthru
          _
      $region52: #{resblocks_forward.1} parent=5 // pred_fallthru
        _
    $region6: #{resblocks_forward.1} parent=1 // loop_footer
      %s20 = sadd.s32 1, %s16
    $region7: #{resblocks_forward.1} parent=1 // loop_footer_branch
      %15 = sbr.rel target = $region3
    $region8: #{resblocks_forward.1} parent=1 // loop_exit
      _
    %1025 = vsyncpa [#allocation3], 1
    %s1026 = scalar_lea.sflag [#allocation3], 1
    %1027 = vsyncpa %s1026, 1
    %1028 = vsyncpa [#allocation6], 1
    %1029 = vsyncpa [#allocation4], 1
    %s1030 = scalar_lea.sflag [#allocation4], 1
    %1031 = vsyncpa %s1030, 1

</llo_original>
